<compile_context>
chip_gen: v6e
topology: v6e:2x2x1
jax: 0.10.0
libtpu: 0.0.40
codegen_flags: <defaults>
</compile_context>

<pallas_src>
import math

import jax
import jax.numpy as jnp
from jax.experimental import pallas as pl
from jax.experimental.pallas import tpu as pltpu


def _level_params(H, W, p):
    """Same window / pad / output-size arithmetic as the PyTorch module."""
    h_wid = int(math.ceil(H / p))
    w_wid = int(math.ceil(W / p))
    h_pad = int((h_wid * p - H + 1) / 2)
    w_pad = int((w_wid * p - W + 1) / 2)
    out_h = (H + 2 * h_pad - h_wid) // h_wid + 1
    out_w = (W + 2 * w_pad - w_wid) // w_wid + 1
    return h_wid, w_wid, h_pad, w_pad, out_h, out_w


def _tree_max(parts):
    """Balanced binary tree of elementwise maxima (VPU only)."""
    parts = list(parts)
    while len(parts) > 1:
        nxt = [jnp.maximum(parts[i], parts[i + 1])
               for i in range(0, len(parts) - 1, 2)]
        if len(parts) % 2:
            nxt.append(parts[-1])
        parts = nxt
    return parts[0]


def _choose_tile_bc(BC, per_bc_bytes, budget_bytes, cap=1024):
    """Largest multiple-of-128 tile of the lane (BC) axis that divides BC,
    fits the double-buffered VMEM budget, and (when possible) leaves >= 2
    grid steps so the pipeline overlaps DMA with compute."""
    if BC % 128 != 0:
        return BC                      # small / ragged BC: single lane block
    best = None
    for cand in range(128, BC + 1, 128):
        if BC % cand or cand > cap or cand * per_bc_bytes > budget_bytes:
            continue
        if cand < BC:
            best = cand                # prefer tiles giving >= 2 grid steps
        elif best is None:
            best = cand
    return best if best is not None else 128


def _spp_fused_call(BC, H, W, levels, tile_bc, dtype):
    """Build one pallas_call computing every pyramid level from one
    VMEM-resident (H, W, TILE_BC) tile.  Outputs one (out_h*out_w, BC) array
    per level."""

    def kernel(x_ref, *o_refs):
        # Static unroll over output cells (fine for typical SPP sizes; for
        # very large out_pool_size a lax.fori_loop over cells would be used).
        # Each cell is a tree of elementwise maxima:
        #   h-reduction: max over window rows of (W, TILE_BC) slabs   (VPU)
        #   w-reduction: max over window cols of (1, TILE_BC) rows    (VPU)
        for (h_wid, w_wid, h_pad, w_pad, out_h, out_w), o_ref in zip(levels, o_refs):
            for oh in range(out_h):
                h0 = max(oh * h_wid - h_pad, 0)
                h1 = min(oh * h_wid - h_pad + h_wid, H)
                band = _tree_max([x_ref[h] for h in range(h0, h1)])   # (W, TILE_BC)
                for ow in range(out_w):
                    w0 = max(ow * w_wid - w_pad, 0)
                    w1 = min(ow * w_wid - w_pad + w_wid, W)
                    cell = _tree_max([band[w:w + 1] for w in range(w0, w1)])  # (1, TILE_BC)
                    r = oh * out_w + ow
                    # Lane-dense store of one pooled cell across the BC tile.
                    o_ref[r:r + 1, :] = cell.astype(o_ref.dtype)

    num_tiles = BC // tile_bc
    out_shape = tuple(
        jax.ShapeDtypeStruct((oh * ow, BC), dtype)
        for (_, _, _, _, oh, ow) in levels
    )
    out_specs = tuple(
        pl.BlockSpec((oh * ow, tile_bc), lambda i: (0, i))
        for (_, _, _, _, oh, ow) in levels
    )
    return pl.pallas_call(
        kernel,
        out_shape=out_shape,
        grid=(num_tiles,),
        in_specs=[pl.BlockSpec((H, W, tile_bc), lambda i: (0, 0, i))],
        out_specs=out_specs,
        compiler_params=pltpu.CompilerParams(
            dimension_semantics=("parallel",),        # megacore split on v7x
            vmem_limit_bytes=32 * 1024 * 1024,        # safe on v5e/v6e/v7x
        ),
    )


def spp_forward(x, out_pool_size):
    """Pallas implementation of SPP.forward.  x: (B, C, H, W)."""
    B, C, H, W = x.shape
    BC = B * C

    levels = []
    for p in out_pool_size:
        h_wid, w_wid, h_pad, w_pad, out_h, out_w = _level_params(H, W, p)
        # PyTorch's nn.MaxPool2d requires pad <= kernel/2; this guarantees
        # every pooling window overlaps the valid region, so clipped-window
        # max == (-inf)-padded max.
        assert 2 * h_pad <= h_wid and 2 * w_pad <= w_wid, \
            "invalid SPP configuration (pad > kernel/2)"
        levels.append((h_wid, w_wid, h_pad, w_pad, out_h, out_w))

    # Layout plumbing: put batch*channel on the lane axis.
    # TODO(synk): for very large inputs the input-side transpose is an extra
    # HBM pass; a (BC, H*W)-native kernel variant would remove it at the cost
    # of cross-lane reductions.
    x_t = jnp.transpose(x, (2, 3, 0, 1)).reshape(H, W, BC)

    total_cells = sum(oh * ow for (_, _, _, _, oh, ow) in levels)
    itemsize = jnp.dtype(x.dtype).itemsize
    # Double-buffered input tile + double-buffered per-level output tiles.
    per_bc_bytes = 2 * H * W * itemsize + 2 * total_cells * itemsize
    tile_bc = _choose_tile_bc(BC, per_bc_bytes, budget_bytes=24 * 1024 * 1024)

    pooled = _spp_fused_call(BC, H, W, tuple(levels), tile_bc, x.dtype)(x_t)
    if not isinstance(pooled, (list, tuple)):
        pooled = (pooled,)

    # Reassemble each level into PyTorch's `.view(batch, -1)` ordering
    # (row-major flatten over (C, out_h, out_w)) and concat along dim 1.
    # These arrays are tiny (total_cells x BC), so this plumbing is cheap.
    outs = []
    for (_, _, _, _, out_h, out_w), lvl in zip(levels, pooled):
        r = lvl.reshape(out_h, out_w, B, C).transpose(2, 3, 0, 1)
        outs.append(r.reshape(B, C * out_h * out_w))
    return jnp.concatenate(outs, axis=1)


def spp_reference(x, out_pool_size):
    """Pure-JAX reference reproducing the PyTorch semantics (validation)."""
    B, C, H, W = x.shape
    outs = []
    for p in out_pool_size:
        h_wid, w_wid, h_pad, w_pad, out_h, out_w = _level_params(H, W, p)
        xp = jnp.pad(x, ((0, 0), (0, 0), (h_pad, h_pad), (w_pad, w_pad)),
                     constant_values=-jnp.inf)
        xc = xp[:, :, :out_h * h_wid, :out_w * w_wid]
        r = xc.reshape(B, C, out_h, h_wid, out_w, w_wid).max(axis=(3, 5))
        outs.append(r.reshape(B, -1))
    return jnp.concatenate(outs, axis=1)


if __name__ == "__main__":
    key = jax.random.PRNGKey(0)
    B, C, H, W = 2, 4, 16, 16
    out_pool_size = (4, 2, 1)   # -> output dim C * (16 + 4 + 1) = 84

    x = jax.random.normal(key, (B, C, H, W), dtype=jnp.float32)

    out = jax.block_until_ready(spp_forward(x, out_pool_size))
    ref = spp_reference(x, out_pool_size)

    assert out.shape == (B, C * sum(p * p for p in out_pool_size)), out.shape
    assert jnp.allclose(out, ref, atol=1e-6, rtol=1e-6), "mismatch vs reference"

    print("KERNEL_OK")
</pallas_src>

<mosaic_0001>
module attributes {stable_mosaic.version = 11 : i64} {
  func.func @kernel(%arg0: i32, %arg1: memref<16x16x8xf32, #tpu.memory_space<vmem>>, %arg2: memref<16x8xf32, #tpu.memory_space<vmem>>, %arg3: memref<4x8xf32, #tpu.memory_space<vmem>>, %arg4: memref<1x8xf32, #tpu.memory_space<vmem>>) attributes {dimension_semantics = [#tpu.dimension_semantics<parallel>], iteration_bounds = array<i64: 1>, scalar_prefetch = 0 : i64, scratch_operands = 0 : i64, tpu.core_type = #tpu.core_type<tc>, window_params = [{transform_indices = @transform_0, window_bounds = array<i64: 16, 16, 8>}, {transform_indices = @transform_1, window_bounds = array<i64: 16, 8>}, {transform_indices = @transform_2, window_bounds = array<i64: 4, 8>}, {transform_indices = @transform_3, window_bounds = array<i64: 1, 8>}]} {
    %c0 = arith.constant 0 : index
    %c0_0 = arith.constant 0 : index
    %c0_1 = arith.constant 0 : index
    %0 = vector.load %arg1[%c0, %c0_0, %c0_1] : memref<16x16x8xf32, #tpu.memory_space<vmem>>, vector<1x16x8xf32>
    %1 = vector.shape_cast %0 : vector<1x16x8xf32> to vector<16x8xf32>
    %c1 = arith.constant 1 : index
    %c0_2 = arith.constant 0 : index
    %c0_3 = arith.constant 0 : index
    %2 = vector.load %arg1[%c1, %c0_2, %c0_3] : memref<16x16x8xf32, #tpu.memory_space<vmem>>, vector<1x16x8xf32>
    %3 = vector.shape_cast %2 : vector<1x16x8xf32> to vector<16x8xf32>
    %c2 = arith.constant 2 : index
    %c0_4 = arith.constant 0 : index
    %c0_5 = arith.constant 0 : index
    %4 = vector.load %arg1[%c2, %c0_4, %c0_5] : memref<16x16x8xf32, #tpu.memory_space<vmem>>, vector<1x16x8xf32>
    %5 = vector.shape_cast %4 : vector<1x16x8xf32> to vector<16x8xf32>
    %c3 = arith.constant 3 : index
    %c0_6 = arith.constant 0 : index
    %c0_7 = arith.constant 0 : index
    %6 = vector.load %arg1[%c3, %c0_6, %c0_7] : memref<16x16x8xf32, #tpu.memory_space<vmem>>, vector<1x16x8xf32>
    %7 = vector.shape_cast %6 : vector<1x16x8xf32> to vector<16x8xf32>
    %8 = arith.maximumf %1, %3 : vector<16x8xf32>
    %9 = arith.maximumf %5, %7 : vector<16x8xf32>
    %10 = arith.maximumf %8, %9 : vector<16x8xf32>
    %11 = vector.extract_strided_slice %10 {offsets = [0, 0], sizes = [1, 8], strides = [1, 1]} : vector<16x8xf32> to vector<1x8xf32>
    %12 = vector.extract_strided_slice %10 {offsets = [1, 0], sizes = [1, 8], strides = [1, 1]} : vector<16x8xf32> to vector<1x8xf32>
    %13 = vector.extract_strided_slice %10 {offsets = [2, 0], sizes = [1, 8], strides = [1, 1]} : vector<16x8xf32> to vector<1x8xf32>
    %14 = vector.extract_strided_slice %10 {offsets = [3, 0], sizes = [1, 8], strides = [1, 1]} : vector<16x8xf32> to vector<1x8xf32>
    %15 = arith.maximumf %11, %12 : vector<1x8xf32>
    %16 = arith.maximumf %13, %14 : vector<1x8xf32>
    %17 = arith.maximumf %15, %16 : vector<1x8xf32>
    %c0_8 = arith.constant 0 : index
    %c0_9 = arith.constant 0 : index
    %18 = vector.load %arg2[%c0_8, %c0_9] : memref<16x8xf32, #tpu.memory_space<vmem>>, vector<1x8xf32>
    tpu.vector_store %arg2[%c0_8, %c0_9], %17 {strides = array<i32>} : memref<16x8xf32, #tpu.memory_space<vmem>>, vector<1x8xf32>,
    %19 = vector.extract_strided_slice %10 {offsets = [4, 0], sizes = [1, 8], strides = [1, 1]} : vector<16x8xf32> to vector<1x8xf32>
    %20 = vector.extract_strided_slice %10 {offsets = [5, 0], sizes = [1, 8], strides = [1, 1]} : vector<16x8xf32> to vector<1x8xf32>
    %21 = vector.extract_strided_slice %10 {offsets = [6, 0], sizes = [1, 8], strides = [1, 1]} : vector<16x8xf32> to vector<1x8xf32>
    %22 = vector.extract_strided_slice %10 {offsets = [7, 0], sizes = [1, 8], strides = [1, 1]} : vector<16x8xf32> to vector<1x8xf32>
    %23 = arith.maximumf %19, %20 : vector<1x8xf32>
    %24 = arith.maximumf %21, %22 : vector<1x8xf32>
    %25 = arith.maximumf %23, %24 : vector<1x8xf32>
    %c1_10 = arith.constant 1 : index
    %c0_11 = arith.constant 0 : index
    %26 = vector.load %arg2[%c1_10, %c0_11] : memref<16x8xf32, #tpu.memory_space<vmem>>, vector<1x8xf32>
    tpu.vector_store %arg2[%c1_10, %c0_11], %25 {strides = array<i32>} : memref<16x8xf32, #tpu.memory_space<vmem>>, vector<1x8xf32>,
    %27 = vector.extract_strided_slice %10 {offsets = [8, 0], sizes = [1, 8], strides = [1, 1]} : vector<16x8xf32> to vector<1x8xf32>
    %28 = vector.extract_strided_slice %10 {offsets = [9, 0], sizes = [1, 8], strides = [1, 1]} : vector<16x8xf32> to vector<1x8xf32>
    %29 = vector.extract_strided_slice %10 {offsets = [10, 0], sizes = [1, 8], strides = [1, 1]} : vector<16x8xf32> to vector<1x8xf32>
    %30 = vector.extract_strided_slice %10 {offsets = [11, 0], sizes = [1, 8], strides = [1, 1]} : vector<16x8xf32> to vector<1x8xf32>
    %31 = arith.maximumf %27, %28 : vector<1x8xf32>
    %32 = arith.maximumf %29, %30 : vector<1x8xf32>
    %33 = arith.maximumf %31, %32 : vector<1x8xf32>
    %c2_12 = arith.constant 2 : index
    %c0_13 = arith.constant 0 : index
    %34 = vector.load %arg2[%c2_12, %c0_13] : memref<16x8xf32, #tpu.memory_space<vmem>>, vector<1x8xf32>
    tpu.vector_store %arg2[%c2_12, %c0_13], %33 {strides = array<i32>} : memref<16x8xf32, #tpu.memory_space<vmem>>, vector<1x8xf32>,
    %35 = vector.extract_strided_slice %10 {offsets = [12, 0], sizes = [1, 8], strides = [1, 1]} : vector<16x8xf32> to vector<1x8xf32>
    %36 = vector.extract_strided_slice %10 {offsets = [13, 0], sizes = [1, 8], strides = [1, 1]} : vector<16x8xf32> to vector<1x8xf32>
    %37 = vector.extract_strided_slice %10 {offsets = [14, 0], sizes = [1, 8], strides = [1, 1]} : vector<16x8xf32> to vector<1x8xf32>
    %38 = vector.extract_strided_slice %10 {offsets = [15, 0], sizes = [1, 8], strides = [1, 1]} : vector<16x8xf32> to vector<1x8xf32>
    %39 = arith.maximumf %35, %36 : vector<1x8xf32>
    %40 = arith.maximumf %37, %38 : vector<1x8xf32>
    %41 = arith.maximumf %39, %40 : vector<1x8xf32>
    %c3_14 = arith.constant 3 : index
    %c0_15 = arith.constant 0 : index
    %42 = vector.load %arg2[%c3_14, %c0_15] : memref<16x8xf32, #tpu.memory_space<vmem>>, vector<1x8xf32>
    tpu.vector_store %arg2[%c3_14, %c0_15], %41 {strides = array<i32>} : memref<16x8xf32, #tpu.memory_space<vmem>>, vector<1x8xf32>,
    %c4 = arith.constant 4 : index
    %c0_16 = arith.constant 0 : index
    %c0_17 = arith.constant 0 : index
    %43 = vector.load %arg1[%c4, %c0_16, %c0_17] : memref<16x16x8xf32, #tpu.memory_space<vmem>>, vector<1x16x8xf32>
    %44 = vector.shape_cast %43 : vector<1x16x8xf32> to vector<16x8xf32>
    %c5 = arith.constant 5 : index
    %c0_18 = arith.constant 0 : index
    %c0_19 = arith.constant 0 : index
    %45 = vector.load %arg1[%c5, %c0_18, %c0_19] : memref<16x16x8xf32, #tpu.memory_space<vmem>>, vector<1x16x8xf32>
    %46 = vector.shape_cast %45 : vector<1x16x8xf32> to vector<16x8xf32>
    %c6 = arith.constant 6 : index
    %c0_20 = arith.constant 0 : index
    %c0_21 = arith.constant 0 : index
    %47 = vector.load %arg1[%c6, %c0_20, %c0_21] : memref<16x16x8xf32, #tpu.memory_space<vmem>>, vector<1x16x8xf32>
    %48 = vector.shape_cast %47 : vector<1x16x8xf32> to vector<16x8xf32>
    %c7 = arith.constant 7 : index
    %c0_22 = arith.constant 0 : index
    %c0_23 = arith.constant 0 : index
    %49 = vector.load %arg1[%c7, %c0_22, %c0_23] : memref<16x16x8xf32, #tpu.memory_space<vmem>>, vector<1x16x8xf32>
    %50 = vector.shape_cast %49 : vector<1x16x8xf32> to vector<16x8xf32>
    %51 = arith.maximumf %44, %46 : vector<16x8xf32>
    %52 = arith.maximumf %48, %50 : vector<16x8xf32>
    %53 = arith.maximumf %51, %52 : vector<16x8xf32>
    %54 = vector.extract_strided_slice %53 {offsets = [0, 0], sizes = [1, 8], strides = [1, 1]} : vector<16x8xf32> to vector<1x8xf32>
    %55 = vector.extract_strided_slice %53 {offsets = [1, 0], sizes = [1, 8], strides = [1, 1]} : vector<16x8xf32> to vector<1x8xf32>
    %56 = vector.extract_strided_slice %53 {offsets = [2, 0], sizes = [1, 8], strides = [1, 1]} : vector<16x8xf32> to vector<1x8xf32>
    %57 = vector.extract_strided_slice %53 {offsets = [3, 0], sizes = [1, 8], strides = [1, 1]} : vector<16x8xf32> to vector<1x8xf32>
    %58 = arith.maximumf %54, %55 : vector<1x8xf32>
    %59 = arith.maximumf %56, %57 : vector<1x8xf32>
    %60 = arith.maximumf %58, %59 : vector<1x8xf32>
    %c4_24 = arith.constant 4 : index
    %c0_25 = arith.constant 0 : index
    %61 = vector.load %arg2[%c4_24, %c0_25] : memref<16x8xf32, #tpu.memory_space<vmem>>, vector<1x8xf32>
    tpu.vector_store %arg2[%c4_24, %c0_25], %60 {strides = array<i32>} : memref<16x8xf32, #tpu.memory_space<vmem>>, vector<1x8xf32>,
    %62 = vector.extract_strided_slice %53 {offsets = [4, 0], sizes = [1, 8], strides = [1, 1]} : vector<16x8xf32> to vector<1x8xf32>
    %63 = vector.extract_strided_slice %53 {offsets = [5, 0], sizes = [1, 8], strides = [1, 1]} : vector<16x8xf32> to vector<1x8xf32>
    %64 = vector.extract_strided_slice %53 {offsets = [6, 0], sizes = [1, 8], strides = [1, 1]} : vector<16x8xf32> to vector<1x8xf32>
    %65 = vector.extract_strided_slice %53 {offsets = [7, 0], sizes = [1, 8], strides = [1, 1]} : vector<16x8xf32> to vector<1x8xf32>
    %66 = arith.maximumf %62, %63 : vector<1x8xf32>
    %67 = arith.maximumf %64, %65 : vector<1x8xf32>
    %68 = arith.maximumf %66, %67 : vector<1x8xf32>
    %c5_26 = arith.constant 5 : index
    %c0_27 = arith.constant 0 : index
    %69 = vector.load %arg2[%c5_26, %c0_27] : memref<16x8xf32, #tpu.memory_space<vmem>>, vector<1x8xf32>
    tpu.vector_store %arg2[%c5_26, %c0_27], %68 {strides = array<i32>} : memref<16x8xf32, #tpu.memory_space<vmem>>, vector<1x8xf32>,
    %70 = vector.extract_strided_slice %53 {offsets = [8, 0], sizes = [1, 8], strides = [1, 1]} : vector<16x8xf32> to vector<1x8xf32>
    %71 = vector.extract_strided_slice %53 {offsets = [9, 0], sizes = [1, 8], strides = [1, 1]} : vector<16x8xf32> to vector<1x8xf32>
    %72 = vector.extract_strided_slice %53 {offsets = [10, 0], sizes = [1, 8], strides = [1, 1]} : vector<16x8xf32> to vector<1x8xf32>
    %73 = vector.extract_strided_slice %53 {offsets = [11, 0], sizes = [1, 8], strides = [1, 1]} : vector<16x8xf32> to vector<1x8xf32>
    %74 = arith.maximumf %70, %71 : vector<1x8xf32>
    %75 = arith.maximumf %72, %73 : vector<1x8xf32>
    %76 = arith.maximumf %74, %75 : vector<1x8xf32>
    %c6_28 = arith.constant 6 : index
    %c0_29 = arith.constant 0 : index
    %77 = vector.load %arg2[%c6_28, %c0_29] : memref<16x8xf32, #tpu.memory_space<vmem>>, vector<1x8xf32>
    tpu.vector_store %arg2[%c6_28, %c0_29], %76 {strides = array<i32>} : memref<16x8xf32, #tpu.memory_space<vmem>>, vector<1x8xf32>,
    %78 = vector.extract_strided_slice %53 {offsets = [12, 0], sizes = [1, 8], strides = [1, 1]} : vector<16x8xf32> to vector<1x8xf32>
    %79 = vector.extract_strided_slice %53 {offsets = [13, 0], sizes = [1, 8], strides = [1, 1]} : vector<16x8xf32> to vector<1x8xf32>
    %80 = vector.extract_strided_slice %53 {offsets = [14, 0], sizes = [1, 8], strides = [1, 1]} : vector<16x8xf32> to vector<1x8xf32>
    %81 = vector.extract_strided_slice %53 {offsets = [15, 0], sizes = [1, 8], strides = [1, 1]} : vector<16x8xf32> to vector<1x8xf32>
    %82 = arith.maximumf %78, %79 : vector<1x8xf32>
    %83 = arith.maximumf %80, %81 : vector<1x8xf32>
    %84 = arith.maximumf %82, %83 : vector<1x8xf32>
    %c7_30 = arith.constant 7 : index
    %c0_31 = arith.constant 0 : index
    %85 = vector.load %arg2[%c7_30, %c0_31] : memref<16x8xf32, #tpu.memory_space<vmem>>, vector<1x8xf32>
    tpu.vector_store %arg2[%c7_30, %c0_31], %84 {strides = array<i32>} : memref<16x8xf32, #tpu.memory_space<vmem>>, vector<1x8xf32>,
    %c8 = arith.constant 8 : index
    %c0_32 = arith.constant 0 : index
    %c0_33 = arith.constant 0 : index
    %86 = vector.load %arg1[%c8, %c0_32, %c0_33] : memref<16x16x8xf32, #tpu.memory_space<vmem>>, vector<1x16x8xf32>
    %87 = vector.shape_cast %86 : vector<1x16x8xf32> to vector<16x8xf32>
    %c9 = arith.constant 9 : index
    %c0_34 = arith.constant 0 : index
    %c0_35 = arith.constant 0 : index
    %88 = vector.load %arg1[%c9, %c0_34, %c0_35] : memref<16x16x8xf32, #tpu.memory_space<vmem>>, vector<1x16x8xf32>
    %89 = vector.shape_cast %88 : vector<1x16x8xf32> to vector<16x8xf32>
    %c10 = arith.constant 10 : index
    %c0_36 = arith.constant 0 : index
    %c0_37 = arith.constant 0 : index
    %90 = vector.load %arg1[%c10, %c0_36, %c0_37] : memref<16x16x8xf32, #tpu.memory_space<vmem>>, vector<1x16x8xf32>
    %91 = vector.shape_cast %90 : vector<1x16x8xf32> to vector<16x8xf32>
    %c11 = arith.constant 11 : index
    %c0_38 = arith.constant 0 : index
    %c0_39 = arith.constant 0 : index
    %92 = vector.load %arg1[%c11, %c0_38, %c0_39] : memref<16x16x8xf32, #tpu.memory_space<vmem>>, vector<1x16x8xf32>
    %93 = vector.shape_cast %92 : vector<1x16x8xf32> to vector<16x8xf32>
    %94 = arith.maximumf %87, %89 : vector<16x8xf32>
    %95 = arith.maximumf %91, %93 : vector<16x8xf32>
    %96 = arith.maximumf %94, %95 : vector<16x8xf32>
    %97 = vector.extract_strided_slice %96 {offsets = [0, 0], sizes = [1, 8], strides = [1, 1]} : vector<16x8xf32> to vector<1x8xf32>
    %98 = vector.extract_strided_slice %96 {offsets = [1, 0], sizes = [1, 8], strides = [1, 1]} : vector<16x8xf32> to vector<1x8xf32>
    %99 = vector.extract_strided_slice %96 {offsets = [2, 0], sizes = [1, 8], strides = [1, 1]} : vector<16x8xf32> to vector<1x8xf32>
    %100 = vector.extract_strided_slice %96 {offsets = [3, 0], sizes = [1, 8], strides = [1, 1]} : vector<16x8xf32> to vector<1x8xf32>
    %101 = arith.maximumf %97, %98 : vector<1x8xf32>
    %102 = arith.maximumf %99, %100 : vector<1x8xf32>
    %103 = arith.maximumf %101, %102 : vector<1x8xf32>
    %c8_40 = arith.constant 8 : index
    %c0_41 = arith.constant 0 : index
    %104 = vector.load %arg2[%c8_40, %c0_41] : memref<16x8xf32, #tpu.memory_space<vmem>>, vector<1x8xf32>
    tpu.vector_store %arg2[%c8_40, %c0_41], %103 {strides = array<i32>} : memref<16x8xf32, #tpu.memory_space<vmem>>, vector<1x8xf32>,
    %105 = vector.extract_strided_slice %96 {offsets = [4, 0], sizes = [1, 8], strides = [1, 1]} : vector<16x8xf32> to vector<1x8xf32>
    %106 = vector.extract_strided_slice %96 {offsets = [5, 0], sizes = [1, 8], strides = [1, 1]} : vector<16x8xf32> to vector<1x8xf32>
    %107 = vector.extract_strided_slice %96 {offsets = [6, 0], sizes = [1, 8], strides = [1, 1]} : vector<16x8xf32> to vector<1x8xf32>
    %108 = vector.extract_strided_slice %96 {offsets = [7, 0], sizes = [1, 8], strides = [1, 1]} : vector<16x8xf32> to vector<1x8xf32>
    %109 = arith.maximumf %105, %106 : vector<1x8xf32>
    %110 = arith.maximumf %107, %108 : vector<1x8xf32>
    %111 = arith.maximumf %109, %110 : vector<1x8xf32>
    %c9_42 = arith.constant 9 : index
    %c0_43 = arith.constant 0 : index
    %112 = vector.load %arg2[%c9_42, %c0_43] : memref<16x8xf32, #tpu.memory_space<vmem>>, vector<1x8xf32>
    tpu.vector_store %arg2[%c9_42, %c0_43], %111 {strides = array<i32>} : memref<16x8xf32, #tpu.memory_space<vmem>>, vector<1x8xf32>,
    %113 = vector.extract_strided_slice %96 {offsets = [8, 0], sizes = [1, 8], strides = [1, 1]} : vector<16x8xf32> to vector<1x8xf32>
    %114 = vector.extract_strided_slice %96 {offsets = [9, 0], sizes = [1, 8], strides = [1, 1]} : vector<16x8xf32> to vector<1x8xf32>
    %115 = vector.extract_strided_slice %96 {offsets = [10, 0], sizes = [1, 8], strides = [1, 1]} : vector<16x8xf32> to vector<1x8xf32>
    %116 = vector.extract_strided_slice %96 {offsets = [11, 0], sizes = [1, 8], strides = [1, 1]} : vector<16x8xf32> to vector<1x8xf32>
    %117 = arith.maximumf %113, %114 : vector<1x8xf32>
    %118 = arith.maximumf %115, %116 : vector<1x8xf32>
    %119 = arith.maximumf %117, %118 : vector<1x8xf32>
    %c10_44 = arith.constant 10 : index
    %c0_45 = arith.constant 0 : index
    %120 = vector.load %arg2[%c10_44, %c0_45] : memref<16x8xf32, #tpu.memory_space<vmem>>, vector<1x8xf32>
    tpu.vector_store %arg2[%c10_44, %c0_45], %119 {strides = array<i32>} : memref<16x8xf32, #tpu.memory_space<vmem>>, vector<1x8xf32>,
    %121 = vector.extract_strided_slice %96 {offsets = [12, 0], sizes = [1, 8], strides = [1, 1]} : vector<16x8xf32> to vector<1x8xf32>
    %122 = vector.extract_strided_slice %96 {offsets = [13, 0], sizes = [1, 8], strides = [1, 1]} : vector<16x8xf32> to vector<1x8xf32>
    %123 = vector.extract_strided_slice %96 {offsets = [14, 0], sizes = [1, 8], strides = [1, 1]} : vector<16x8xf32> to vector<1x8xf32>
    %124 = vector.extract_strided_slice %96 {offsets = [15, 0], sizes = [1, 8], strides = [1, 1]} : vector<16x8xf32> to vector<1x8xf32>
    %125 = arith.maximumf %121, %122 : vector<1x8xf32>
    %126 = arith.maximumf %123, %124 : vector<1x8xf32>
    %127 = arith.maximumf %125, %126 : vector<1x8xf32>
    %c11_46 = arith.constant 11 : index
    %c0_47 = arith.constant 0 : index
    %128 = vector.load %arg2[%c11_46, %c0_47] : memref<16x8xf32, #tpu.memory_space<vmem>>, vector<1x8xf32>
    tpu.vector_store %arg2[%c11_46, %c0_47], %127 {strides = array<i32>} : memref<16x8xf32, #tpu.memory_space<vmem>>, vector<1x8xf32>,
    %c12 = arith.constant 12 : index
    %c0_48 = arith.constant 0 : index
    %c0_49 = arith.constant 0 : index
    %129 = vector.load %arg1[%c12, %c0_48, %c0_49] : memref<16x16x8xf32, #tpu.memory_space<vmem>>, vector<1x16x8xf32>
    %130 = vector.shape_cast %129 : vector<1x16x8xf32> to vector<16x8xf32>
    %c13 = arith.constant 13 : index
    %c0_50 = arith.constant 0 : index
    %c0_51 = arith.constant 0 : index
    %131 = vector.load %arg1[%c13, %c0_50, %c0_51] : memref<16x16x8xf32, #tpu.memory_space<vmem>>, vector<1x16x8xf32>
    %132 = vector.shape_cast %131 : vector<1x16x8xf32> to vector<16x8xf32>
    %c14 = arith.constant 14 : index
    %c0_52 = arith.constant 0 : index
    %c0_53 = arith.constant 0 : index
    %133 = vector.load %arg1[%c14, %c0_52, %c0_53] : memref<16x16x8xf32, #tpu.memory_space<vmem>>, vector<1x16x8xf32>
    %134 = vector.shape_cast %133 : vector<1x16x8xf32> to vector<16x8xf32>
    %c15 = arith.constant 15 : index
    %c0_54 = arith.constant 0 : index
    %c0_55 = arith.constant 0 : index
    %135 = vector.load %arg1[%c15, %c0_54, %c0_55] : memref<16x16x8xf32, #tpu.memory_space<vmem>>, vector<1x16x8xf32>
    %136 = vector.shape_cast %135 : vector<1x16x8xf32> to vector<16x8xf32>
    %137 = arith.maximumf %130, %132 : vector<16x8xf32>
    %138 = arith.maximumf %134, %136 : vector<16x8xf32>
    %139 = arith.maximumf %137, %138 : vector<16x8xf32>
    %140 = vector.extract_strided_slice %139 {offsets = [0, 0], sizes = [1, 8], strides = [1, 1]} : vector<16x8xf32> to vector<1x8xf32>
    %141 = vector.extract_strided_slice %139 {offsets = [1, 0], sizes = [1, 8], strides = [1, 1]} : vector<16x8xf32> to vector<1x8xf32>
    %142 = vector.extract_strided_slice %139 {offsets = [2, 0], sizes = [1, 8], strides = [1, 1]} : vector<16x8xf32> to vector<1x8xf32>
    %143 = vector.extract_strided_slice %139 {offsets = [3, 0], sizes = [1, 8], strides = [1, 1]} : vector<16x8xf32> to vector<1x8xf32>
    %144 = arith.maximumf %140, %141 : vector<1x8xf32>
    %145 = arith.maximumf %142, %143 : vector<1x8xf32>
    %146 = arith.maximumf %144, %145 : vector<1x8xf32>
    %c12_56 = arith.constant 12 : index
    %c0_57 = arith.constant 0 : index
    %147 = vector.load %arg2[%c12_56, %c0_57] : memref<16x8xf32, #tpu.memory_space<vmem>>, vector<1x8xf32>
    tpu.vector_store %arg2[%c12_56, %c0_57], %146 {strides = array<i32>} : memref<16x8xf32, #tpu.memory_space<vmem>>, vector<1x8xf32>,
    %148 = vector.extract_strided_slice %139 {offsets = [4, 0], sizes = [1, 8], strides = [1, 1]} : vector<16x8xf32> to vector<1x8xf32>
    %149 = vector.extract_strided_slice %139 {offsets = [5, 0], sizes = [1, 8], strides = [1, 1]} : vector<16x8xf32> to vector<1x8xf32>
    %150 = vector.extract_strided_slice %139 {offsets = [6, 0], sizes = [1, 8], strides = [1, 1]} : vector<16x8xf32> to vector<1x8xf32>
    %151 = vector.extract_strided_slice %139 {offsets = [7, 0], sizes = [1, 8], strides = [1, 1]} : vector<16x8xf32> to vector<1x8xf32>
    %152 = arith.maximumf %148, %149 : vector<1x8xf32>
    %153 = arith.maximumf %150, %151 : vector<1x8xf32>
    %154 = arith.maximumf %152, %153 : vector<1x8xf32>
    %c13_58 = arith.constant 13 : index
    %c0_59 = arith.constant 0 : index
    %155 = vector.load %arg2[%c13_58, %c0_59] : memref<16x8xf32, #tpu.memory_space<vmem>>, vector<1x8xf32>
    tpu.vector_store %arg2[%c13_58, %c0_59], %154 {strides = array<i32>} : memref<16x8xf32, #tpu.memory_space<vmem>>, vector<1x8xf32>,
    %156 = vector.extract_strided_slice %139 {offsets = [8, 0], sizes = [1, 8], strides = [1, 1]} : vector<16x8xf32> to vector<1x8xf32>
    %157 = vector.extract_strided_slice %139 {offsets = [9, 0], sizes = [1, 8], strides = [1, 1]} : vector<16x8xf32> to vector<1x8xf32>
    %158 = vector.extract_strided_slice %139 {offsets = [10, 0], sizes = [1, 8], strides = [1, 1]} : vector<16x8xf32> to vector<1x8xf32>
    %159 = vector.extract_strided_slice %139 {offsets = [11, 0], sizes = [1, 8], strides = [1, 1]} : vector<16x8xf32> to vector<1x8xf32>
    %160 = arith.maximumf %156, %157 : vector<1x8xf32>
    %161 = arith.maximumf %158, %159 : vector<1x8xf32>
    %162 = arith.maximumf %160, %161 : vector<1x8xf32>
    %c14_60 = arith.constant 14 : index
    %c0_61 = arith.constant 0 : index
    %163 = vector.load %arg2[%c14_60, %c0_61] : memref<16x8xf32, #tpu.memory_space<vmem>>, vector<1x8xf32>
    tpu.vector_store %arg2[%c14_60, %c0_61], %162 {strides = array<i32>} : memref<16x8xf32, #tpu.memory_space<vmem>>, vector<1x8xf32>,
    %164 = vector.extract_strided_slice %139 {offsets = [12, 0], sizes = [1, 8], strides = [1, 1]} : vector<16x8xf32> to vector<1x8xf32>
    %165 = vector.extract_strided_slice %139 {offsets = [13, 0], sizes = [1, 8], strides = [1, 1]} : vector<16x8xf32> to vector<1x8xf32>
    %166 = vector.extract_strided_slice %139 {offsets = [14, 0], sizes = [1, 8], strides = [1, 1]} : vector<16x8xf32> to vector<1x8xf32>
    %167 = vector.extract_strided_slice %139 {offsets = [15, 0], sizes = [1, 8], strides = [1, 1]} : vector<16x8xf32> to vector<1x8xf32>
    %168 = arith.maximumf %164, %165 : vector<1x8xf32>
    %169 = arith.maximumf %166, %167 : vector<1x8xf32>
    %170 = arith.maximumf %168, %169 : vector<1x8xf32>
    %c15_62 = arith.constant 15 : index
    %c0_63 = arith.constant 0 : index
    %171 = vector.load %arg2[%c15_62, %c0_63] : memref<16x8xf32, #tpu.memory_space<vmem>>, vector<1x8xf32>
    tpu.vector_store %arg2[%c15_62, %c0_63], %170 {strides = array<i32>} : memref<16x8xf32, #tpu.memory_space<vmem>>, vector<1x8xf32>,
    %c0_64 = arith.constant 0 : index
    %c0_65 = arith.constant 0 : index
    %c0_66 = arith.constant 0 : index
    %172 = vector.load %arg1[%c0_64, %c0_65, %c0_66] : memref<16x16x8xf32, #tpu.memory_space<vmem>>, vector<1x16x8xf32>
    %173 = vector.shape_cast %172 : vector<1x16x8xf32> to vector<16x8xf32>
    %c1_67 = arith.constant 1 : index
    %c0_68 = arith.constant 0 : index
    %c0_69 = arith.constant 0 : index
    %174 = vector.load %arg1[%c1_67, %c0_68, %c0_69] : memref<16x16x8xf32, #tpu.memory_space<vmem>>, vector<1x16x8xf32>
    %175 = vector.shape_cast %174 : vector<1x16x8xf32> to vector<16x8xf32>
    %c2_70 = arith.constant 2 : index
    %c0_71 = arith.constant 0 : index
    %c0_72 = arith.constant 0 : index
    %176 = vector.load %arg1[%c2_70, %c0_71, %c0_72] : memref<16x16x8xf32, #tpu.memory_space<vmem>>, vector<1x16x8xf32>
    %177 = vector.shape_cast %176 : vector<1x16x8xf32> to vector<16x8xf32>
    %c3_73 = arith.constant 3 : index
    %c0_74 = arith.constant 0 : index
    %c0_75 = arith.constant 0 : index
    %178 = vector.load %arg1[%c3_73, %c0_74, %c0_75] : memref<16x16x8xf32, #tpu.memory_space<vmem>>, vector<1x16x8xf32>
    %179 = vector.shape_cast %178 : vector<1x16x8xf32> to vector<16x8xf32>
    %c4_76 = arith.constant 4 : index
    %c0_77 = arith.constant 0 : index
    %c0_78 = arith.constant 0 : index
    %180 = vector.load %arg1[%c4_76, %c0_77, %c0_78] : memref<16x16x8xf32, #tpu.memory_space<vmem>>, vector<1x16x8xf32>
    %181 = vector.shape_cast %180 : vector<1x16x8xf32> to vector<16x8xf32>
    %c5_79 = arith.constant 5 : index
    %c0_80 = arith.constant 0 : index
    %c0_81 = arith.constant 0 : index
    %182 = vector.load %arg1[%c5_79, %c0_80, %c0_81] : memref<16x16x8xf32, #tpu.memory_space<vmem>>, vector<1x16x8xf32>
    %183 = vector.shape_cast %182 : vector<1x16x8xf32> to vector<16x8xf32>
    %c6_82 = arith.constant 6 : index
    %c0_83 = arith.constant 0 : index
    %c0_84 = arith.constant 0 : index
    %184 = vector.load %arg1[%c6_82, %c0_83, %c0_84] : memref<16x16x8xf32, #tpu.memory_space<vmem>>, vector<1x16x8xf32>
    %185 = vector.shape_cast %184 : vector<1x16x8xf32> to vector<16x8xf32>
    %c7_85 = arith.constant 7 : index
    %c0_86 = arith.constant 0 : index
    %c0_87 = arith.constant 0 : index
    %186 = vector.load %arg1[%c7_85, %c0_86, %c0_87] : memref<16x16x8xf32, #tpu.memory_space<vmem>>, vector<1x16x8xf32>
    %187 = vector.shape_cast %186 : vector<1x16x8xf32> to vector<16x8xf32>
    %188 = arith.maximumf %173, %175 : vector<16x8xf32>
    %189 = arith.maximumf %177, %179 : vector<16x8xf32>
    %190 = arith.maximumf %181, %183 : vector<16x8xf32>
    %191 = arith.maximumf %185, %187 : vector<16x8xf32>
    %192 = arith.maximumf %188, %189 : vector<16x8xf32>
    %193 = arith.maximumf %190, %191 : vector<16x8xf32>
    %194 = arith.maximumf %192, %193 : vector<16x8xf32>
    %195 = vector.extract_strided_slice %194 {offsets = [0, 0], sizes = [1, 8], strides = [1, 1]} : vector<16x8xf32> to vector<1x8xf32>
    %196 = vector.extract_strided_slice %194 {offsets = [1, 0], sizes = [1, 8], strides = [1, 1]} : vector<16x8xf32> to vector<1x8xf32>
    %197 = vector.extract_strided_slice %194 {offsets = [2, 0], sizes = [1, 8], strides = [1, 1]} : vector<16x8xf32> to vector<1x8xf32>
    %198 = vector.extract_strided_slice %194 {offsets = [3, 0], sizes = [1, 8], strides = [1, 1]} : vector<16x8xf32> to vector<1x8xf32>
    %199 = vector.extract_strided_slice %194 {offsets = [4, 0], sizes = [1, 8], strides = [1, 1]} : vector<16x8xf32> to vector<1x8xf32>
    %200 = vector.extract_strided_slice %194 {offsets = [5, 0], sizes = [1, 8], strides = [1, 1]} : vector<16x8xf32> to vector<1x8xf32>
    %201 = vector.extract_strided_slice %194 {offsets = [6, 0], sizes = [1, 8], strides = [1, 1]} : vector<16x8xf32> to vector<1x8xf32>
    %202 = vector.extract_strided_slice %194 {offsets = [7, 0], sizes = [1, 8], strides = [1, 1]} : vector<16x8xf32> to vector<1x8xf32>
    %203 = arith.maximumf %195, %196 : vector<1x8xf32>
    %204 = arith.maximumf %197, %198 : vector<1x8xf32>
    %205 = arith.maximumf %199, %200 : vector<1x8xf32>
    %206 = arith.maximumf %201, %202 : vector<1x8xf32>
    %207 = arith.maximumf %203, %204 : vector<1x8xf32>
    %208 = arith.maximumf %205, %206 : vector<1x8xf32>
    %209 = arith.maximumf %207, %208 : vector<1x8xf32>
    %c0_88 = arith.constant 0 : index
    %c0_89 = arith.constant 0 : index
    %210 = vector.load %arg3[%c0_88, %c0_89] : memref<4x8xf32, #tpu.memory_space<vmem>>, vector<1x8xf32>
    tpu.vector_store %arg3[%c0_88, %c0_89], %209 {strides = array<i32>} : memref<4x8xf32, #tpu.memory_space<vmem>>, vector<1x8xf32>,
    %211 = vector.extract_strided_slice %194 {offsets = [8, 0], sizes = [1, 8], strides = [1, 1]} : vector<16x8xf32> to vector<1x8xf32>
    %212 = vector.extract_strided_slice %194 {offsets = [9, 0], sizes = [1, 8], strides = [1, 1]} : vector<16x8xf32> to vector<1x8xf32>
    %213 = vector.extract_strided_slice %194 {offsets = [10, 0], sizes = [1, 8], strides = [1, 1]} : vector<16x8xf32> to vector<1x8xf32>
    %214 = vector.extract_strided_slice %194 {offsets = [11, 0], sizes = [1, 8], strides = [1, 1]} : vector<16x8xf32> to vector<1x8xf32>
    %215 = vector.extract_strided_slice %194 {offsets = [12, 0], sizes = [1, 8], strides = [1, 1]} : vector<16x8xf32> to vector<1x8xf32>
    %216 = vector.extract_strided_slice %194 {offsets = [13, 0], sizes = [1, 8], strides = [1, 1]} : vector<16x8xf32> to vector<1x8xf32>
    %217 = vector.extract_strided_slice %194 {offsets = [14, 0], sizes = [1, 8], strides = [1, 1]} : vector<16x8xf32> to vector<1x8xf32>
    %218 = vector.extract_strided_slice %194 {offsets = [15, 0], sizes = [1, 8], strides = [1, 1]} : vector<16x8xf32> to vector<1x8xf32>
    %219 = arith.maximumf %211, %212 : vector<1x8xf32>
    %220 = arith.maximumf %213, %214 : vector<1x8xf32>
    %221 = arith.maximumf %215, %216 : vector<1x8xf32>
    %222 = arith.maximumf %217, %218 : vector<1x8xf32>
    %223 = arith.maximumf %219, %220 : vector<1x8xf32>
    %224 = arith.maximumf %221, %222 : vector<1x8xf32>
    %225 = arith.maximumf %223, %224 : vector<1x8xf32>
    %c1_90 = arith.constant 1 : index
    %c0_91 = arith.constant 0 : index
    %226 = vector.load %arg3[%c1_90, %c0_91] : memref<4x8xf32, #tpu.memory_space<vmem>>, vector<1x8xf32>
    tpu.vector_store %arg3[%c1_90, %c0_91], %225 {strides = array<i32>} : memref<4x8xf32, #tpu.memory_space<vmem>>, vector<1x8xf32>,
    %c8_92 = arith.constant 8 : index
    %c0_93 = arith.constant 0 : index
    %c0_94 = arith.constant 0 : index
    %227 = vector.load %arg1[%c8_92, %c0_93, %c0_94] : memref<16x16x8xf32, #tpu.memory_space<vmem>>, vector<1x16x8xf32>
    %228 = vector.shape_cast %227 : vector<1x16x8xf32> to vector<16x8xf32>
    %c9_95 = arith.constant 9 : index
    %c0_96 = arith.constant 0 : index
    %c0_97 = arith.constant 0 : index
    %229 = vector.load %arg1[%c9_95, %c0_96, %c0_97] : memref<16x16x8xf32, #tpu.memory_space<vmem>>, vector<1x16x8xf32>
    %230 = vector.shape_cast %229 : vector<1x16x8xf32> to vector<16x8xf32>
    %c10_98 = arith.constant 10 : index
    %c0_99 = arith.constant 0 : index
    %c0_100 = arith.constant 0 : index
    %231 = vector.load %arg1[%c10_98, %c0_99, %c0_100] : memref<16x16x8xf32, #tpu.memory_space<vmem>>, vector<1x16x8xf32>
    %232 = vector.shape_cast %231 : vector<1x16x8xf32> to vector<16x8xf32>
    %c11_101 = arith.constant 11 : index
    %c0_102 = arith.constant 0 : index
    %c0_103 = arith.constant 0 : index
    %233 = vector.load %arg1[%c11_101, %c0_102, %c0_103] : memref<16x16x8xf32, #tpu.memory_space<vmem>>, vector<1x16x8xf32>
    %234 = vector.shape_cast %233 : vector<1x16x8xf32> to vector<16x8xf32>
    %c12_104 = arith.constant 12 : index
    %c0_105 = arith.constant 0 : index
    %c0_106 = arith.constant 0 : index
    %235 = vector.load %arg1[%c12_104, %c0_105, %c0_106] : memref<16x16x8xf32, #tpu.memory_space<vmem>>, vector<1x16x8xf32>
    %236 = vector.shape_cast %235 : vector<1x16x8xf32> to vector<16x8xf32>
    %c13_107 = arith.constant 13 : index
    %c0_108 = arith.constant 0 : index
    %c0_109 = arith.constant 0 : index
    %237 = vector.load %arg1[%c13_107, %c0_108, %c0_109] : memref<16x16x8xf32, #tpu.memory_space<vmem>>, vector<1x16x8xf32>
    %238 = vector.shape_cast %237 : vector<1x16x8xf32> to vector<16x8xf32>
    %c14_110 = arith.constant 14 : index
    %c0_111 = arith.constant 0 : index
    %c0_112 = arith.constant 0 : index
    %239 = vector.load %arg1[%c14_110, %c0_111, %c0_112] : memref<16x16x8xf32, #tpu.memory_space<vmem>>, vector<1x16x8xf32>
    %240 = vector.shape_cast %239 : vector<1x16x8xf32> to vector<16x8xf32>
    %c15_113 = arith.constant 15 : index
    %c0_114 = arith.constant 0 : index
    %c0_115 = arith.constant 0 : index
    %241 = vector.load %arg1[%c15_113, %c0_114, %c0_115] : memref<16x16x8xf32, #tpu.memory_space<vmem>>, vector<1x16x8xf32>
    %242 = vector.shape_cast %241 : vector<1x16x8xf32> to vector<16x8xf32>
    %243 = arith.maximumf %228, %230 : vector<16x8xf32>
    %244 = arith.maximumf %232, %234 : vector<16x8xf32>
    %245 = arith.maximumf %236, %238 : vector<16x8xf32>
    %246 = arith.maximumf %240, %242 : vector<16x8xf32>
    %247 = arith.maximumf %243, %244 : vector<16x8xf32>
    %248 = arith.maximumf %245, %246 : vector<16x8xf32>
    %249 = arith.maximumf %247, %248 : vector<16x8xf32>
    %250 = vector.extract_strided_slice %249 {offsets = [0, 0], sizes = [1, 8], strides = [1, 1]} : vector<16x8xf32> to vector<1x8xf32>
    %251 = vector.extract_strided_slice %249 {offsets = [1, 0], sizes = [1, 8], strides = [1, 1]} : vector<16x8xf32> to vector<1x8xf32>
    %252 = vector.extract_strided_slice %249 {offsets = [2, 0], sizes = [1, 8], strides = [1, 1]} : vector<16x8xf32> to vector<1x8xf32>
    %253 = vector.extract_strided_slice %249 {offsets = [3, 0], sizes = [1, 8], strides = [1, 1]} : vector<16x8xf32> to vector<1x8xf32>
    %254 = vector.extract_strided_slice %249 {offsets = [4, 0], sizes = [1, 8], strides = [1, 1]} : vector<16x8xf32> to vector<1x8xf32>
    %255 = vector.extract_strided_slice %249 {offsets = [5, 0], sizes = [1, 8], strides = [1, 1]} : vector<16x8xf32> to vector<1x8xf32>
    %256 = vector.extract_strided_slice %249 {offsets = [6, 0], sizes = [1, 8], strides = [1, 1]} : vector<16x8xf32> to vector<1x8xf32>
    %257 = vector.extract_strided_slice %249 {offsets = [7, 0], sizes = [1, 8], strides = [1, 1]} : vector<16x8xf32> to vector<1x8xf32>
    %258 = arith.maximumf %250, %251 : vector<1x8xf32>
    %259 = arith.maximumf %252, %253 : vector<1x8xf32>
    %260 = arith.maximumf %254, %255 : vector<1x8xf32>
    %261 = arith.maximumf %256, %257 : vector<1x8xf32>
    %262 = arith.maximumf %258, %259 : vector<1x8xf32>
    %263 = arith.maximumf %260, %261 : vector<1x8xf32>
    %264 = arith.maximumf %262, %263 : vector<1x8xf32>
    %c2_116 = arith.constant 2 : index
    %c0_117 = arith.constant 0 : index
    %265 = vector.load %arg3[%c2_116, %c0_117] : memref<4x8xf32, #tpu.memory_space<vmem>>, vector<1x8xf32>
    tpu.vector_store %arg3[%c2_116, %c0_117], %264 {strides = array<i32>} : memref<4x8xf32, #tpu.memory_space<vmem>>, vector<1x8xf32>,
    %266 = vector.extract_strided_slice %249 {offsets = [8, 0], sizes = [1, 8], strides = [1, 1]} : vector<16x8xf32> to vector<1x8xf32>
    %267 = vector.extract_strided_slice %249 {offsets = [9, 0], sizes = [1, 8], strides = [1, 1]} : vector<16x8xf32> to vector<1x8xf32>
    %268 = vector.extract_strided_slice %249 {offsets = [10, 0], sizes = [1, 8], strides = [1, 1]} : vector<16x8xf32> to vector<1x8xf32>
    %269 = vector.extract_strided_slice %249 {offsets = [11, 0], sizes = [1, 8], strides = [1, 1]} : vector<16x8xf32> to vector<1x8xf32>
    %270 = vector.extract_strided_slice %249 {offsets = [12, 0], sizes = [1, 8], strides = [1, 1]} : vector<16x8xf32> to vector<1x8xf32>
    %271 = vector.extract_strided_slice %249 {offsets = [13, 0], sizes = [1, 8], strides = [1, 1]} : vector<16x8xf32> to vector<1x8xf32>
    %272 = vector.extract_strided_slice %249 {offsets = [14, 0], sizes = [1, 8], strides = [1, 1]} : vector<16x8xf32> to vector<1x8xf32>
    %273 = vector.extract_strided_slice %249 {offsets = [15, 0], sizes = [1, 8], strides = [1, 1]} : vector<16x8xf32> to vector<1x8xf32>
    %274 = arith.maximumf %266, %267 : vector<1x8xf32>
    %275 = arith.maximumf %268, %269 : vector<1x8xf32>
    %276 = arith.maximumf %270, %271 : vector<1x8xf32>
    %277 = arith.maximumf %272, %273 : vector<1x8xf32>
    %278 = arith.maximumf %274, %275 : vector<1x8xf32>
    %279 = arith.maximumf %276, %277 : vector<1x8xf32>
    %280 = arith.maximumf %278, %279 : vector<1x8xf32>
    %c3_118 = arith.constant 3 : index
    %c0_119 = arith.constant 0 : index
    %281 = vector.load %arg3[%c3_118, %c0_119] : memref<4x8xf32, #tpu.memory_space<vmem>>, vector<1x8xf32>
    tpu.vector_store %arg3[%c3_118, %c0_119], %280 {strides = array<i32>} : memref<4x8xf32, #tpu.memory_space<vmem>>, vector<1x8xf32>,
    %c0_120 = arith.constant 0 : index
    %c0_121 = arith.constant 0 : index
    %c0_122 = arith.constant 0 : index
    %282 = vector.load %arg1[%c0_120, %c0_121, %c0_122] : memref<16x16x8xf32, #tpu.memory_space<vmem>>, vector<1x16x8xf32>
    %283 = vector.shape_cast %282 : vector<1x16x8xf32> to vector<16x8xf32>
    %c1_123 = arith.constant 1 : index
    %c0_124 = arith.constant 0 : index
    %c0_125 = arith.constant 0 : index
    %284 = vector.load %arg1[%c1_123, %c0_124, %c0_125] : memref<16x16x8xf32, #tpu.memory_space<vmem>>, vector<1x16x8xf32>
    %285 = vector.shape_cast %284 : vector<1x16x8xf32> to vector<16x8xf32>
    %c2_126 = arith.constant 2 : index
    %c0_127 = arith.constant 0 : index
    %c0_128 = arith.constant 0 : index
    %286 = vector.load %arg1[%c2_126, %c0_127, %c0_128] : memref<16x16x8xf32, #tpu.memory_space<vmem>>, vector<1x16x8xf32>
    %287 = vector.shape_cast %286 : vector<1x16x8xf32> to vector<16x8xf32>
    %c3_129 = arith.constant 3 : index
    %c0_130 = arith.constant 0 : index
    %c0_131 = arith.constant 0 : index
    %288 = vector.load %arg1[%c3_129, %c0_130, %c0_131] : memref<16x16x8xf32, #tpu.memory_space<vmem>>, vector<1x16x8xf32>
    %289 = vector.shape_cast %288 : vector<1x16x8xf32> to vector<16x8xf32>
    %c4_132 = arith.constant 4 : index
    %c0_133 = arith.constant 0 : index
    %c0_134 = arith.constant 0 : index
    %290 = vector.load %arg1[%c4_132, %c0_133, %c0_134] : memref<16x16x8xf32, #tpu.memory_space<vmem>>, vector<1x16x8xf32>
    %291 = vector.shape_cast %290 : vector<1x16x8xf32> to vector<16x8xf32>
    %c5_135 = arith.constant 5 : index
    %c0_136 = arith.constant 0 : index
    %c0_137 = arith.constant 0 : index
    %292 = vector.load %arg1[%c5_135, %c0_136, %c0_137] : memref<16x16x8xf32, #tpu.memory_space<vmem>>, vector<1x16x8xf32>
    %293 = vector.shape_cast %292 : vector<1x16x8xf32> to vector<16x8xf32>
    %c6_138 = arith.constant 6 : index
    %c0_139 = arith.constant 0 : index
    %c0_140 = arith.constant 0 : index
    %294 = vector.load %arg1[%c6_138, %c0_139, %c0_140] : memref<16x16x8xf32, #tpu.memory_space<vmem>>, vector<1x16x8xf32>
    %295 = vector.shape_cast %294 : vector<1x16x8xf32> to vector<16x8xf32>
    %c7_141 = arith.constant 7 : index
    %c0_142 = arith.constant 0 : index
    %c0_143 = arith.constant 0 : index
    %296 = vector.load %arg1[%c7_141, %c0_142, %c0_143] : memref<16x16x8xf32, #tpu.memory_space<vmem>>, vector<1x16x8xf32>
    %297 = vector.shape_cast %296 : vector<1x16x8xf32> to vector<16x8xf32>
    %c8_144 = arith.constant 8 : index
    %c0_145 = arith.constant 0 : index
    %c0_146 = arith.constant 0 : index
    %298 = vector.load %arg1[%c8_144, %c0_145, %c0_146] : memref<16x16x8xf32, #tpu.memory_space<vmem>>, vector<1x16x8xf32>
    %299 = vector.shape_cast %298 : vector<1x16x8xf32> to vector<16x8xf32>
    %c9_147 = arith.constant 9 : index
    %c0_148 = arith.constant 0 : index
    %c0_149 = arith.constant 0 : index
    %300 = vector.load %arg1[%c9_147, %c0_148, %c0_149] : memref<16x16x8xf32, #tpu.memory_space<vmem>>, vector<1x16x8xf32>
    %301 = vector.shape_cast %300 : vector<1x16x8xf32> to vector<16x8xf32>
    %c10_150 = arith.constant 10 : index
    %c0_151 = arith.constant 0 : index
    %c0_152 = arith.constant 0 : index
    %302 = vector.load %arg1[%c10_150, %c0_151, %c0_152] : memref<16x16x8xf32, #tpu.memory_space<vmem>>, vector<1x16x8xf32>
    %303 = vector.shape_cast %302 : vector<1x16x8xf32> to vector<16x8xf32>
    %c11_153 = arith.constant 11 : index
    %c0_154 = arith.constant 0 : index
    %c0_155 = arith.constant 0 : index
    %304 = vector.load %arg1[%c11_153, %c0_154, %c0_155] : memref<16x16x8xf32, #tpu.memory_space<vmem>>, vector<1x16x8xf32>
    %305 = vector.shape_cast %304 : vector<1x16x8xf32> to vector<16x8xf32>
    %c12_156 = arith.constant 12 : index
    %c0_157 = arith.constant 0 : index
    %c0_158 = arith.constant 0 : index
    %306 = vector.load %arg1[%c12_156, %c0_157, %c0_158] : memref<16x16x8xf32, #tpu.memory_space<vmem>>, vector<1x16x8xf32>
    %307 = vector.shape_cast %306 : vector<1x16x8xf32> to vector<16x8xf32>
    %c13_159 = arith.constant 13 : index
    %c0_160 = arith.constant 0 : index
    %c0_161 = arith.constant 0 : index
    %308 = vector.load %arg1[%c13_159, %c0_160, %c0_161] : memref<16x16x8xf32, #tpu.memory_space<vmem>>, vector<1x16x8xf32>
    %309 = vector.shape_cast %308 : vector<1x16x8xf32> to vector<16x8xf32>
    %c14_162 = arith.constant 14 : index
    %c0_163 = arith.constant 0 : index
    %c0_164 = arith.constant 0 : index
    %310 = vector.load %arg1[%c14_162, %c0_163, %c0_164] : memref<16x16x8xf32, #tpu.memory_space<vmem>>, vector<1x16x8xf32>
    %311 = vector.shape_cast %310 : vector<1x16x8xf32> to vector<16x8xf32>
    %c15_165 = arith.constant 15 : index
    %c0_166 = arith.constant 0 : index
    %c0_167 = arith.constant 0 : index
    %312 = vector.load %arg1[%c15_165, %c0_166, %c0_167] : memref<16x16x8xf32, #tpu.memory_space<vmem>>, vector<1x16x8xf32>
    %313 = vector.shape_cast %312 : vector<1x16x8xf32> to vector<16x8xf32>
    %314 = arith.maximumf %283, %285 : vector<16x8xf32>
    %315 = arith.maximumf %287, %289 : vector<16x8xf32>
    %316 = arith.maximumf %291, %293 : vector<16x8xf32>
    %317 = arith.maximumf %295, %297 : vector<16x8xf32>
    %318 = arith.maximumf %299, %301 : vector<16x8xf32>
    %319 = arith.maximumf %303, %305 : vector<16x8xf32>
    %320 = arith.maximumf %307, %309 : vector<16x8xf32>
    %321 = arith.maximumf %311, %313 : vector<16x8xf32>
    %322 = arith.maximumf %314, %315 : vector<16x8xf32>
    %323 = arith.maximumf %316, %317 : vector<16x8xf32>
    %324 = arith.maximumf %318, %319 : vector<16x8xf32>
    %325 = arith.maximumf %320, %321 : vector<16x8xf32>
    %326 = arith.maximumf %322, %323 : vector<16x8xf32>
    %327 = arith.maximumf %324, %325 : vector<16x8xf32>
    %328 = arith.maximumf %326, %327 : vector<16x8xf32>
    %329 = vector.extract_strided_slice %328 {offsets = [0, 0], sizes = [1, 8], strides = [1, 1]} : vector<16x8xf32> to vector<1x8xf32>
    %330 = vector.extract_strided_slice %328 {offsets = [1, 0], sizes = [1, 8], strides = [1, 1]} : vector<16x8xf32> to vector<1x8xf32>
    %331 = vector.extract_strided_slice %328 {offsets = [2, 0], sizes = [1, 8], strides = [1, 1]} : vector<16x8xf32> to vector<1x8xf32>
    %332 = vector.extract_strided_slice %328 {offsets = [3, 0], sizes = [1, 8], strides = [1, 1]} : vector<16x8xf32> to vector<1x8xf32>
    %333 = vector.extract_strided_slice %328 {offsets = [4, 0], sizes = [1, 8], strides = [1, 1]} : vector<16x8xf32> to vector<1x8xf32>
    %334 = vector.extract_strided_slice %328 {offsets = [5, 0], sizes = [1, 8], strides = [1, 1]} : vector<16x8xf32> to vector<1x8xf32>
    %335 = vector.extract_strided_slice %328 {offsets = [6, 0], sizes = [1, 8], strides = [1, 1]} : vector<16x8xf32> to vector<1x8xf32>
    %336 = vector.extract_strided_slice %328 {offsets = [7, 0], sizes = [1, 8], strides = [1, 1]} : vector<16x8xf32> to vector<1x8xf32>
    %337 = vector.extract_strided_slice %328 {offsets = [8, 0], sizes = [1, 8], strides = [1, 1]} : vector<16x8xf32> to vector<1x8xf32>
    %338 = vector.extract_strided_slice %328 {offsets = [9, 0], sizes = [1, 8], strides = [1, 1]} : vector<16x8xf32> to vector<1x8xf32>
    %339 = vector.extract_strided_slice %328 {offsets = [10, 0], sizes = [1, 8], strides = [1, 1]} : vector<16x8xf32> to vector<1x8xf32>
    %340 = vector.extract_strided_slice %328 {offsets = [11, 0], sizes = [1, 8], strides = [1, 1]} : vector<16x8xf32> to vector<1x8xf32>
    %341 = vector.extract_strided_slice %328 {offsets = [12, 0], sizes = [1, 8], strides = [1, 1]} : vector<16x8xf32> to vector<1x8xf32>
    %342 = vector.extract_strided_slice %328 {offsets = [13, 0], sizes = [1, 8], strides = [1, 1]} : vector<16x8xf32> to vector<1x8xf32>
    %343 = vector.extract_strided_slice %328 {offsets = [14, 0], sizes = [1, 8], strides = [1, 1]} : vector<16x8xf32> to vector<1x8xf32>
    %344 = vector.extract_strided_slice %328 {offsets = [15, 0], sizes = [1, 8], strides = [1, 1]} : vector<16x8xf32> to vector<1x8xf32>
    %345 = arith.maximumf %329, %330 : vector<1x8xf32>
    %346 = arith.maximumf %331, %332 : vector<1x8xf32>
    %347 = arith.maximumf %333, %334 : vector<1x8xf32>
    %348 = arith.maximumf %335, %336 : vector<1x8xf32>
    %349 = arith.maximumf %337, %338 : vector<1x8xf32>
    %350 = arith.maximumf %339, %340 : vector<1x8xf32>
    %351 = arith.maximumf %341, %342 : vector<1x8xf32>
    %352 = arith.maximumf %343, %344 : vector<1x8xf32>
    %353 = arith.maximumf %345, %346 : vector<1x8xf32>
    %354 = arith.maximumf %347, %348 : vector<1x8xf32>
    %355 = arith.maximumf %349, %350 : vector<1x8xf32>
    %356 = arith.maximumf %351, %352 : vector<1x8xf32>
    %357 = arith.maximumf %353, %354 : vector<1x8xf32>
    %358 = arith.maximumf %355, %356 : vector<1x8xf32>
    %359 = arith.maximumf %357, %358 : vector<1x8xf32>
    %c0_168 = arith.constant 0 : index
    %c0_169 = arith.constant 0 : index
    %360 = vector.load %arg4[%c0_168, %c0_169] : memref<1x8xf32, #tpu.memory_space<vmem>>, vector<1x8xf32>
    tpu.vector_store %arg4[%c0_168, %c0_169], %359 {strides = array<i32>} : memref<1x8xf32, #tpu.memory_space<vmem>>, vector<1x8xf32>,
    return
  }
  func.func @transform_0(%arg0: i32) -> (i32, i32, i32) {
    %c0_i32 = arith.constant 0 : i32
    %c0_i32_0 = arith.constant 0 : i32
    %c0_i32_1 = arith.constant 0 : i32
    return %c0_i32, %c0_i32_0, %arg0 : i32, i32, i32
  }
  func.func @transform_1(%arg0: i32) -> (i32, i32) {
    %c0_i32 = arith.constant 0 : i32
    %c0_i32_0 = arith.constant 0 : i32
    return %c0_i32, %arg0 : i32, i32
  }
  func.func @transform_2(%arg0: i32) -> (i32, i32) {
    %c0_i32 = arith.constant 0 : i32
    %c0_i32_0 = arith.constant 0 : i32
    return %c0_i32, %arg0 : i32, i32
  }
  func.func @transform_3(%arg0: i32) -> (i32, i32) {
    %c0_i32 = arith.constant 0 : i32
    %c0_i32_0 = arith.constant 0 : i32
    return %c0_i32, %arg0 : i32, i32
  }
}

</mosaic_0001>

<llo_original>
// kernel: tpu_custom_call.1
$region0: #{tpu_custom_call.1}
  #allocation0 [shape = 'u32[]', space=smem, size = 0x4, offset = 0x4, fixed_abs, tag = 'smem constant byte address 0x4 - core index']
  #allocation1 [shape = 'u32[144,128]{1,0:T(1,128)}', space=vmem, size = 0x12000, scoped, tag = 'internal scratch']
  %s0 = inlined_call_operand.vmem [shape: f32[16,16,8], index: 0, kind: input, shape index: {}]
  %s1 = inlined_call_operand.vmem [shape: f32[16,8], index: 1, kind: output, shape index: {0}]
  %s2 = inlined_call_operand.hbm [shape: f32[4,8], index: 2, kind: output, shape index: {1}]
  %s3 = inlined_call_operand.hbm [shape: f32[1,8], index: 3, kind: output, shape index: {2}]
  %4 = xla_tuple %s1, %s2, %s3
  %s5 = sld [smem:[#allocation0]]
  $region30: #{tpu_custom_call.1} parent=0
    _
  %s7 = ssub.s32 1, %s5
  %s8 = scalar_select 0, %s7, %s5
  $region1: #{tpu_custom_call.1} parent=0
    #allocation2 [shape = 'u8[2048]{0}', space=vmem, size = 0x800, scoped, tag = 'output window, operand 1, single buffered']
    #allocation3 [shape = 's32[1]{0}', space=sflag, size = 0x4, scoped, tag = 'scoped memory for tpu_custom_call.1']
    #allocation4 [shape = 'u8[512]{0}', space=vmem, size = 0x400, scoped, tag = 'output window, operand 2, single buffered']
    #allocation5 [shape = 's32[1]{0}', space=sflag, size = 0x4, scoped, tag = 'scoped memory for tpu_custom_call.1']
    %9 = vsyncpa [#allocation3], 0
    %10 = vsyncpa [#allocation5], 0
    // Predicated region
    $region2: #{tpu_custom_call.1} parent=1 // pred_check
      _
    $region3: #{tpu_custom_call.1} parent=1 // pred_check_branch
      %12 = sbr.rel (0) target = $region5
    $region4: #{tpu_custom_call.1} parent=1 // pred_region
      _
    $region5: #{tpu_custom_call.1} parent=1 // pred_fallthru
      _
    %v13 = vld [vmem:[%s0] sm:$0xff]
    %v14 = vld [vmem:[%s0 + $0x8] sm:$0xff]
    %s15 = scalar_lea.vmem %s0, 16
    %v16 = vld [vmem:[%s15] sm:$0xff]
    %v17 = vld [vmem:[%s15 + $0x8] sm:$0xff]
    %s18 = scalar_lea.vmem %s0, 32
    %v19 = vld [vmem:[%s18] sm:$0xff]
    %v20 = vld [vmem:[%s18 + $0x8] sm:$0xff]
    %s21 = scalar_lea.vmem %s0, 48
    %v22 = vld [vmem:[%s21] sm:$0xff]
    %v23 = vld [vmem:[%s21 + $0x8] sm:$0xff]
    %v24 = vmax.f32 %v13, %v16
    %v25 = vmax.f32 %v14, %v17
    %v26 = vmax.f32 %v19, %v22
    %v27 = vmax.f32 %v20, %v23
    %v28 = vmax.f32 %v24, %v26
    %v29 = vmax.f32 %v25, %v27
    %v31 = vrot.slane %v28, 1
    %v33 = vmax.f32 %v28, %v31
    %v35 = vrot.slane %v33, 2
    %v37 = vmax.f32 %v33, %v35
    %vm38 = vcmask 57344
    %39 = vst.msk [vmem:[%s1] sm:$0x1] %vm38, %v37
    %vm40 = vcmask 61444
    %41 = vst.msk [vmem:[%s1 - $0x3] sm:$0x10] %vm40, %v37
    %v43 = vrot.slane %v29, 1
    %v45 = vmax.f32 %v29, %v43
    %v47 = vrot.slane %v45, 2
    %v49 = vmax.f32 %v45, %v47
    %50 = vst.msk [vmem:[%s1 + $0x2] sm:$0x1] %vm38, %v49
    %51 = vst.msk [vmem:[%s1 - $0x1] sm:$0x10] %vm40, %v49
    %s52 = scalar_lea.vmem %s0, 64
    %v53 = vld [vmem:[%s52] sm:$0xff]
    %v54 = vld [vmem:[%s52 + $0x8] sm:$0xff]
    %s55 = scalar_lea.vmem %s0, 80
    %v56 = vld [vmem:[%s55] sm:$0xff]
    %v57 = vld [vmem:[%s55 + $0x8] sm:$0xff]
    %s58 = scalar_lea.vmem %s0, 96
    %v59 = vld [vmem:[%s58] sm:$0xff]
    %v60 = vld [vmem:[%s58 + $0x8] sm:$0xff]
    %s61 = scalar_lea.vmem %s0, 112
    %v62 = vld [vmem:[%s61] sm:$0xff]
    %v63 = vld [vmem:[%s61 + $0x8] sm:$0xff]
    %v64 = vmax.f32 %v53, %v56
    %v65 = vmax.f32 %v54, %v57
    %v66 = vmax.f32 %v59, %v62
    %v67 = vmax.f32 %v60, %v63
    %v68 = vmax.f32 %v64, %v66
    %v69 = vmax.f32 %v65, %v67
    %v71 = vrot.slane %v68, 1
    %v73 = vmax.f32 %v68, %v71
    %v75 = vrot.slane %v73, 2
    %v77 = vmax.f32 %v73, %v75
    %78 = vst.msk [vmem:[%s1 + $0x4] sm:$0x1] %vm38, %v77
    %79 = vst.msk [vmem:[%s1 + $0x1] sm:$0x10] %vm40, %v77
    %v81 = vrot.slane %v69, 1
    %v83 = vmax.f32 %v69, %v81
    %v85 = vrot.slane %v83, 2
    %v87 = vmax.f32 %v83, %v85
    %88 = vst.msk [vmem:[%s1 + $0x6] sm:$0x1] %vm38, %v87
    %89 = vst.msk [vmem:[%s1 + $0x3] sm:$0x10] %vm40, %v87
    %s90 = scalar_lea.vmem %s0, 128
    %v91 = vld [vmem:[%s90] sm:$0xff]
    %v92 = vld [vmem:[%s90 + $0x8] sm:$0xff]
    %s93 = scalar_lea.vmem %s0, 144
    %v94 = vld [vmem:[%s93] sm:$0xff]
    %v95 = vld [vmem:[%s93 + $0x8] sm:$0xff]
    %s96 = scalar_lea.vmem %s0, 160
    %v97 = vld [vmem:[%s96] sm:$0xff]
    %v98 = vld [vmem:[%s96 + $0x8] sm:$0xff]
    %s99 = scalar_lea.vmem %s0, 176
    %v100 = vld [vmem:[%s99] sm:$0xff]
    %v101 = vld [vmem:[%s99 + $0x8] sm:$0xff]
    %v102 = vmax.f32 %v91, %v94
    %v103 = vmax.f32 %v92, %v95
    %v104 = vmax.f32 %v97, %v100
    %v105 = vmax.f32 %v98, %v101
    %v106 = vmax.f32 %v102, %v104
    %v107 = vmax.f32 %v103, %v105
    %v109 = vrot.slane %v106, 1
    %v111 = vmax.f32 %v106, %v109
    %v113 = vrot.slane %v111, 2
    %v115 = vmax.f32 %v111, %v113
    %116 = vst.msk [vmem:[%s1 + $0x8] sm:$0x1] %vm38, %v115
    %117 = vst.msk [vmem:[%s1 + $0x5] sm:$0x10] %vm40, %v115
    %v119 = vrot.slane %v107, 1
    %v121 = vmax.f32 %v107, %v119
    %v123 = vrot.slane %v121, 2
    %v125 = vmax.f32 %v121, %v123
    %126 = vst.msk [vmem:[%s1 + $0xa] sm:$0x1] %vm38, %v125
    %127 = vst.msk [vmem:[%s1 + $0x7] sm:$0x10] %vm40, %v125
    %s128 = scalar_lea.vmem %s0, 192
    %v129 = vld [vmem:[%s128] sm:$0xff]
    %v130 = vld [vmem:[%s128 + $0x8] sm:$0xff]
    %s131 = scalar_lea.vmem %s0, 208
    %v132 = vld [vmem:[%s131] sm:$0xff]
    %v133 = vld [vmem:[%s131 + $0x8] sm:$0xff]
    %s134 = scalar_lea.vmem %s0, 224
    %v135 = vld [vmem:[%s134] sm:$0xff]
    %v136 = vld [vmem:[%s134 + $0x8] sm:$0xff]
    %s137 = scalar_lea.vmem %s0, 240
    %v138 = vld [vmem:[%s137] sm:$0xff]
    %v139 = vld [vmem:[%s137 + $0x8] sm:$0xff]
    %v140 = vmax.f32 %v129, %v132
    %v141 = vmax.f32 %v130, %v133
    %v142 = vmax.f32 %v135, %v138
    %v143 = vmax.f32 %v136, %v139
    %v144 = vmax.f32 %v140, %v142
    %v145 = vmax.f32 %v141, %v143
    %v147 = vrot.slane %v144, 1
    %v149 = vmax.f32 %v144, %v147
    %v151 = vrot.slane %v149, 2
    %v153 = vmax.f32 %v149, %v151
    %154 = vst.msk [vmem:[%s1 + $0xc] sm:$0x1] %vm38, %v153
    %155 = vst.msk [vmem:[%s1 + $0x9] sm:$0x10] %vm40, %v153
    %v157 = vrot.slane %v145, 1
    %v159 = vmax.f32 %v145, %v157
    %v161 = vrot.slane %v159, 2
    %v163 = vmax.f32 %v159, %v161
    %164 = vst.msk [vmem:[%s1 + $0xe] sm:$0x1] %vm38, %v163
    %165 = vst.msk [vmem:[%s1 + $0xb] sm:$0x10] %vm40, %v163
    %v166 = vld [vmem:[%s0] sm:$0xff]
    %v167 = vld [vmem:[%s0 + $0x8] sm:$0xff]
    %v168 = vld [vmem:[%s15] sm:$0xff]
    %v169 = vld [vmem:[%s15 + $0x8] sm:$0xff]
    %v170 = vld [vmem:[%s18] sm:$0xff]
    %v171 = vld [vmem:[%s18 + $0x8] sm:$0xff]
    %v172 = vld [vmem:[%s21] sm:$0xff]
    %v173 = vld [vmem:[%s21 + $0x8] sm:$0xff]
    %v174 = vld [vmem:[%s52] sm:$0xff]
    %v175 = vld [vmem:[%s52 + $0x8] sm:$0xff]
    %v176 = vld [vmem:[%s55] sm:$0xff]
    %v177 = vld [vmem:[%s55 + $0x8] sm:$0xff]
    %v178 = vld [vmem:[%s58] sm:$0xff]
    %v179 = vld [vmem:[%s58 + $0x8] sm:$0xff]
    %v180 = vld [vmem:[%s61] sm:$0xff]
    %v181 = vld [vmem:[%s61 + $0x8] sm:$0xff]
    %v182 = vmax.f32 %v166, %v168
    %v183 = vmax.f32 %v167, %v169
    %v184 = vmax.f32 %v170, %v172
    %v185 = vmax.f32 %v171, %v173
    %v186 = vmax.f32 %v174, %v176
    %v187 = vmax.f32 %v175, %v177
    %v188 = vmax.f32 %v178, %v180
    %v189 = vmax.f32 %v179, %v181
    %v190 = vmax.f32 %v182, %v184
    %v191 = vmax.f32 %v183, %v185
    %v192 = vmax.f32 %v186, %v188
    %v193 = vmax.f32 %v187, %v189
    %v194 = vmax.f32 %v190, %v192
    %v195 = vmax.f32 %v191, %v193
    %v197 = vrot.slane %v194, 1
    %v199 = vmax.f32 %v194, %v197
    %v201 = vrot.slane %v199, 2
    %v203 = vmax.f32 %v199, %v201
    %v205 = vrot.slane %v203, 4
    %v207 = vmax.f32 %v203, %v205
    %208 = vst.msk [vmem:[#allocation2] sm:$0x1] %vm38, %v207
    %v210 = vrot.slane %v195, 1
    %v212 = vmax.f32 %v195, %v210
    %v214 = vrot.slane %v212, 2
    %v216 = vmax.f32 %v212, %v214
    %v218 = vrot.slane %v216, 4
    %v220 = vmax.f32 %v216, %v218
    %221 = vst.msk [vmem:[#allocation2 + $0x1] sm:$0x1] %vm38, %v220
    %v222 = vld [vmem:[%s90] sm:$0xff]
    %v223 = vld [vmem:[%s90 + $0x8] sm:$0xff]
    %v224 = vld [vmem:[%s93] sm:$0xff]
    %v225 = vld [vmem:[%s93 + $0x8] sm:$0xff]
    %v226 = vld [vmem:[%s96] sm:$0xff]
    %v227 = vld [vmem:[%s96 + $0x8] sm:$0xff]
    %v228 = vld [vmem:[%s99] sm:$0xff]
    %v229 = vld [vmem:[%s99 + $0x8] sm:$0xff]
    %v230 = vld [vmem:[%s128] sm:$0xff]
    %v231 = vld [vmem:[%s128 + $0x8] sm:$0xff]
    %v232 = vld [vmem:[%s131] sm:$0xff]
    %v233 = vld [vmem:[%s131 + $0x8] sm:$0xff]
    %v234 = vld [vmem:[%s134] sm:$0xff]
    %v235 = vld [vmem:[%s134 + $0x8] sm:$0xff]
    %v236 = vld [vmem:[%s137] sm:$0xff]
    %v237 = vld [vmem:[%s137 + $0x8] sm:$0xff]
    %v238 = vmax.f32 %v222, %v224
    %v239 = vmax.f32 %v223, %v225
    %v240 = vmax.f32 %v226, %v228
    %v241 = vmax.f32 %v227, %v229
    %v242 = vmax.f32 %v230, %v232
    %v243 = vmax.f32 %v231, %v233
    %v244 = vmax.f32 %v234, %v236
    %v245 = vmax.f32 %v235, %v237
    %v246 = vmax.f32 %v238, %v240
    %v247 = vmax.f32 %v239, %v241
    %v248 = vmax.f32 %v242, %v244
    %v249 = vmax.f32 %v243, %v245
    %v250 = vmax.f32 %v246, %v248
    %v251 = vmax.f32 %v247, %v249
    %v253 = vrot.slane %v250, 1
    %v255 = vmax.f32 %v250, %v253
    %v257 = vrot.slane %v255, 2
    %v259 = vmax.f32 %v255, %v257
    %v261 = vrot.slane %v259, 4
    %v263 = vmax.f32 %v259, %v261
    %264 = vst.msk [vmem:[#allocation2 + $0x2] sm:$0x1] %vm38, %v263
    %v266 = vrot.slane %v251, 1
    %v268 = vmax.f32 %v251, %v266
    %v270 = vrot.slane %v268, 2
    %v272 = vmax.f32 %v268, %v270
    %v274 = vrot.slane %v272, 4
    %v276 = vmax.f32 %v272, %v274
    %277 = vst.msk [vmem:[#allocation2 + $0x3] sm:$0x1] %vm38, %v276
    %v278 = vld [vmem:[%s0] sm:$0xff]
    %v279 = vld [vmem:[%s0 + $0x8] sm:$0xff]
    %v280 = vld [vmem:[%s15] sm:$0xff]
    %v281 = vld [vmem:[%s15 + $0x8] sm:$0xff]
    %v282 = vld [vmem:[%s18] sm:$0xff]
    %v283 = vld [vmem:[%s18 + $0x8] sm:$0xff]
    %v284 = vld [vmem:[%s21] sm:$0xff]
    %v285 = vld [vmem:[%s21 + $0x8] sm:$0xff]
    %v286 = vld [vmem:[%s52] sm:$0xff]
    %v287 = vld [vmem:[%s52 + $0x8] sm:$0xff]
    %v288 = vld [vmem:[%s55] sm:$0xff]
    %v289 = vld [vmem:[%s55 + $0x8] sm:$0xff]
    %v290 = vld [vmem:[%s58] sm:$0xff]
    %v291 = vld [vmem:[%s58 + $0x8] sm:$0xff]
    %v292 = vld [vmem:[%s61] sm:$0xff]
    %v293 = vld [vmem:[%s61 + $0x8] sm:$0xff]
    %v294 = vld [vmem:[%s90] sm:$0xff]
    %v295 = vld [vmem:[%s90 + $0x8] sm:$0xff]
    %v296 = vld [vmem:[%s93] sm:$0xff]
    %v297 = vld [vmem:[%s93 + $0x8] sm:$0xff]
    %v298 = vld [vmem:[%s96] sm:$0xff]
    %v299 = vld [vmem:[%s96 + $0x8] sm:$0xff]
    %v300 = vld [vmem:[%s99] sm:$0xff]
    %v301 = vld [vmem:[%s99 + $0x8] sm:$0xff]
    %v302 = vld [vmem:[%s128] sm:$0xff]
    %v303 = vld [vmem:[%s128 + $0x8] sm:$0xff]
    %v304 = vld [vmem:[%s131] sm:$0xff]
    %v305 = vld [vmem:[%s131 + $0x8] sm:$0xff]
    %v306 = vld [vmem:[%s134] sm:$0xff]
    %v307 = vld [vmem:[%s134 + $0x8] sm:$0xff]
    %v308 = vld [vmem:[%s137] sm:$0xff]
    %v309 = vld [vmem:[%s137 + $0x8] sm:$0xff]
    %v310 = vmax.f32 %v278, %v280
    %v311 = vmax.f32 %v279, %v281
    %v312 = vmax.f32 %v282, %v284
    %v313 = vmax.f32 %v283, %v285
    %v314 = vmax.f32 %v286, %v288
    %v315 = vmax.f32 %v287, %v289
    %v316 = vmax.f32 %v290, %v292
    %v317 = vmax.f32 %v291, %v293
    %v318 = vmax.f32 %v294, %v296
    %v319 = vmax.f32 %v295, %v297
    %v320 = vmax.f32 %v298, %v300
    %v321 = vmax.f32 %v299, %v301
    %v322 = vmax.f32 %v302, %v304
    %v323 = vmax.f32 %v303, %v305
    %v324 = vmax.f32 %v306, %v308
    %v325 = vmax.f32 %v307, %v309
    %v326 = vmax.f32 %v310, %v312
    %v327 = vmax.f32 %v311, %v313
    %v328 = vmax.f32 %v314, %v316
    %v329 = vmax.f32 %v315, %v317
    %v330 = vmax.f32 %v318, %v320
    %v331 = vmax.f32 %v319, %v321
    %v332 = vmax.f32 %v322, %v324
    %v333 = vmax.f32 %v323, %v325
    %v334 = vmax.f32 %v326, %v328
    %v335 = vmax.f32 %v327, %v329
    %v336 = vmax.f32 %v330, %v332
    %v337 = vmax.f32 %v331, %v333
    %v338 = vmax.f32 %v334, %v336
    %v339 = vmax.f32 %v335, %v337
    %v341 = vrot.slane %v338, 1
    %v343 = vmax.f32 %v338, %v341
    %v345 = vrot.slane %v339, 1
    %v347 = vmax.f32 %v339, %v345
    %v349 = vrot.slane %v343, 2
    %v351 = vmax.f32 %v343, %v349
    %v353 = vrot.slane %v347, 2
    %v355 = vmax.f32 %v347, %v353
    %v357 = vrot.slane %v351, 4
    %v359 = vmax.f32 %v351, %v357
    %v361 = vrot.slane %v355, 4
    %v363 = vmax.f32 %v355, %v361
    %v364 = vmax.f32 %v359, %v363
    %365 = vst.msk [vmem:[#allocation4] sm:$0x1] %vm38, %v364
    // Predicated region
    $region6: #{tpu_custom_call.1} parent=1 // pred_check
      _
    $region7: #{tpu_custom_call.1} parent=1 // pred_check_branch
      %367 = sbr.rel (0) target = $region9
    $region8: #{tpu_custom_call.1} parent=1 // pred_region
      _
    $region9: #{tpu_custom_call.1} parent=1 // pred_fallthru
      _
    // Predicated region
    $region10: #{tpu_custom_call.1} parent=1 // pred_check
      _
    $region11: #{tpu_custom_call.1} parent=1 // pred_check_branch
      %369 = sbr.rel (0) target = $region13
    $region12: #{tpu_custom_call.1} parent=1 // pred_region
      %s371 = ssub.s32 64, 64
      %372 = vsyncadd [#allocation3], %s371
      %s374 = sshll.u32 [#allocation2], 4
      %s375 = int_to_ptr.vmem [resolvable:$true] %s374
      %377 = dma.vmem_to_hbm [thread:$0]  %s375, 64, %s2, [#allocation3]
    $region13: #{tpu_custom_call.1} parent=1 // pred_fallthru
      _
    // Predicated region
    $region14: #{tpu_custom_call.1} parent=1 // pred_check
      _
    $region15: #{tpu_custom_call.1} parent=1 // pred_check_branch
      %379 = sbr.rel (0) target = $region17
    $region16: #{tpu_custom_call.1} parent=1 // pred_region
      %s381 = ssub.s32 16, 16
      %382 = vsyncadd [#allocation5], %s381
      %s384 = sshll.u32 [#allocation4], 4
      %s385 = int_to_ptr.vmem [resolvable:$true] %s384
      %387 = dma.vmem_to_hbm [thread:$0]  %s385, 16, %s3, [#allocation5]
    $region17: #{tpu_custom_call.1} parent=1 // pred_fallthru
      _
    // Predicated region
    $region18: #{tpu_custom_call.1} parent=1 // pred_check
      _
    $region19: #{tpu_custom_call.1} parent=1 // pred_check_branch
      %389 = sbr.rel (0) target = $region21
    $region20: #{tpu_custom_call.1} parent=1 // pred_region
      _
    $region21: #{tpu_custom_call.1} parent=1 // pred_fallthru
      _
    // Predicated region
    $region22: #{tpu_custom_call.1} parent=1 // pred_check
      _
    $region23: #{tpu_custom_call.1} parent=1 // pred_check_branch
      %391 = sbr.rel (0) target = $region25
    $region24: #{tpu_custom_call.1} parent=1 // pred_region
      %392 = dma.done [#allocation3], 64
    $region25: #{tpu_custom_call.1} parent=1 // pred_fallthru
      _
    // Predicated region
    $region26: #{tpu_custom_call.1} parent=1 // pred_check
      _
    $region27: #{tpu_custom_call.1} parent=1 // pred_check_branch
      %394 = sbr.rel (0) target = $region29
    $region28: #{tpu_custom_call.1} parent=1 // pred_region
      %395 = dma.done [#allocation5], 16
    $region29: #{tpu_custom_call.1} parent=1 // pred_fallthru
      _
    %396 = vsyncpa [#allocation3], 1
    %397 = vsyncpa [#allocation5], 1

</llo_original>
